<compile_context>
chip_gen: v5e
topology: v5e:2x2
jax: 0.10.0
libtpu: 0.0.40
codegen_flags: <defaults>
</compile_context>

<pallas_src>
import functools

import jax
import jax.numpy as jnp
from jax.experimental import pallas as pl
from jax.experimental.pallas import tpu as pltpu

_LANE = 128
_SUBLANE = 8


def _round_up(x, m):
    return (x + m - 1) // m * m


def _classifier_kernel(x_ref, w1_ref, b1_ref, w2_ref, b2_ref, h_ref, c_ref):
    # Linear1: bf16 MXU matmul with f32 accumulation, then bias + ReLU.
    h = jnp.dot(
        x_ref[...].astype(jnp.bfloat16),
        w1_ref[...],
        preferred_element_type=jnp.float32,
    )
    h = jnp.maximum(h + b1_ref[...], 0.0)
    h_ref[...] = h.astype(h_ref.dtype)

    # Linear2 on the in-register f32 hidden activations; the output block is
    # lane-padded to a multiple of 128, so this store is lane-dense.
    c = jnp.dot(
        h.astype(jnp.bfloat16), w2_ref[...], preferred_element_type=jnp.float32
    )
    c_ref[...] = (c + b2_ref[...]).astype(c_ref.dtype)


def prepare_params(w1, b1, w2, b2):
    """Cast / pad parameters into the kernel's preferred layout.

    w1 -> bfloat16 [in, hidden]
    b1 -> float32  [1, hidden]
    w2 -> bfloat16 [hidden, padded_classes]  (zero-padded to a 128 multiple)
    b2 -> float32  [1, padded_classes]
    """
    hidden, num_classes = w2.shape
    padded_c = _round_up(num_classes, _LANE)
    w1_bf16 = w1.astype(jnp.bfloat16)
    w2_pad = (
        jnp.zeros((hidden, padded_c), jnp.bfloat16)
        .at[:, :num_classes]
        .set(w2.astype(jnp.bfloat16))
    )
    b2_pad = (
        jnp.zeros((1, padded_c), jnp.float32)
        .at[:, :num_classes]
        .set(b2.reshape(1, num_classes).astype(jnp.float32))
    )
    return w1_bf16, b1.reshape(1, hidden).astype(jnp.float32), w2_pad, b2_pad


@functools.partial(jax.jit, static_argnames=("num_classes", "block_batch"))
def classifier_forward(x, w1_bf16, b1, w2_pad, b2_pad, *, num_classes,
                       block_batch=512):
    """Classifier forward pass.

    x: [B, input_size] float32.  Params as produced by prepare_params.
    Returns (h [B, hidden], c [B, num_classes]).
    """
    batch, input_size = x.shape
    hidden = w1_bf16.shape[1]
    padded_c = w2_pad.shape[1]

    # Batch tile: a multiple of the f32 sublane (8), capped at block_batch.
    tb = min(block_batch, _round_up(batch, _SUBLANE))
    padded_b = _round_up(batch, tb)
    if padded_b != batch:
        x = jnp.pad(x, ((0, padded_b - batch), (0, 0)))
    grid = (padded_b // tb,)

    h_pad, c_pad = pl.pallas_call(
        _classifier_kernel,
        out_shape=(
            jax.ShapeDtypeStruct((padded_b, hidden), jnp.float32),
            jax.ShapeDtypeStruct((padded_b, padded_c), jnp.float32),
        ),
        grid=grid,
        in_specs=[
            # Activations: tiled along batch.
            pl.BlockSpec((tb, input_size), lambda i: (i, 0)),
            # Weights / biases: constant block -> VMEM-resident across steps.
            pl.BlockSpec((input_size, hidden), lambda i: (0, 0)),
            pl.BlockSpec((1, hidden), lambda i: (0, 0)),
            pl.BlockSpec((hidden, padded_c), lambda i: (0, 0)),
            pl.BlockSpec((1, padded_c), lambda i: (0, 0)),
        ],
        out_specs=(
            pl.BlockSpec((tb, hidden), lambda i: (i, 0)),
            pl.BlockSpec((tb, padded_c), lambda i: (i, 0)),
        ),
        compiler_params=pltpu.CompilerParams(
            dimension_semantics=("parallel",),
        ),
    )(x, w1_bf16, b1, w2_pad, b2_pad)

    return h_pad[:batch], c_pad[:batch, :num_classes]


def init_params(key, input_size=512, hidden=256, num_classes=10):
    """Deterministic init mimicking PyTorch nn.Linear defaults
    (uniform(-1/sqrt(fan_in), 1/sqrt(fan_in))).  Stored as [in, out]."""
    k1, k2, k3, k4 = jax.random.split(key, 4)
    bound1 = 1.0 / jnp.sqrt(float(input_size))
    bound2 = 1.0 / jnp.sqrt(float(hidden))
    w1 = jax.random.uniform(k1, (input_size, hidden), jnp.float32, -bound1, bound1)
    b1 = jax.random.uniform(k2, (1, hidden), jnp.float32, -bound1, bound1)
    w2 = jax.random.uniform(k3, (hidden, num_classes), jnp.float32, -bound2, bound2)
    b2 = jax.random.uniform(k4, (1, num_classes), jnp.float32, -bound2, bound2)
    return w1, b1, w2, b2


if __name__ == "__main__":
    key = jax.random.PRNGKey(0)
    k_x, k_p = jax.random.split(key)

    batch = 8
    input_size = 512
    hidden = 256
    num_classes = 10

    x = jax.random.normal(k_x, (batch, input_size), jnp.float32)
    w1, b1, w2, b2 = init_params(k_p, input_size, hidden, num_classes)
    w1_bf16, b1_p, w2_pad, b2_pad = prepare_params(w1, b1, w2, b2)

    h, c = classifier_forward(
        x, w1_bf16, b1_p, w2_pad, b2_pad, num_classes=num_classes
    )
    jax.block_until_ready((h, c))

    assert h.shape == (batch, hidden) and c.shape == (batch, num_classes)
    assert h.dtype == jnp.float32 and c.dtype == jnp.float32

    # Reference: full f32 PyTorch-equivalent math (loose tol for bf16 matmuls).
    h_ref = jnp.maximum(x @ w1 + b1, 0.0)
    c_ref = h_ref @ w2 + b2
    assert jnp.allclose(h, h_ref, atol=3e-2, rtol=3e-2), float(
        jnp.max(jnp.abs(h - h_ref))
    )
    assert jnp.allclose(c, c_ref, atol=3e-2, rtol=3e-2), float(
        jnp.max(jnp.abs(c - c_ref))
    )
    # ReLU semantics: h must be non-negative.
    assert float(jnp.min(h)) >= 0.0

    print("KERNEL_OK")
</pallas_src>

<mosaic_0001>
module attributes {stable_mosaic.version = 11 : i64} {
  func.func @_classifier_kernel(%arg0: i32, %arg1: memref<8x512xf32, #tpu.memory_space<vmem>>, %arg2: memref<512x256xbf16, #tpu.memory_space<vmem>>, %arg3: memref<1x256xf32, #tpu.memory_space<vmem>>, %arg4: memref<256x128xbf16, #tpu.memory_space<vmem>>, %arg5: memref<1x128xf32, #tpu.memory_space<vmem>>, %arg6: memref<8x256xf32, #tpu.memory_space<vmem>>, %arg7: memref<8x128xf32, #tpu.memory_space<vmem>>) attributes {dimension_semantics = [#tpu.dimension_semantics<parallel>], iteration_bounds = array<i64: 1>, scalar_prefetch = 0 : i64, scratch_operands = 0 : i64, tpu.core_type = #tpu.core_type<tc>, window_params = [{transform_indices = @transform_0, window_bounds = array<i64: 8, 512>}, {pipeline_mode = #tpu.pipeline_mode<synchronous>, transform_indices = @transform_1, window_bounds = array<i64: 512, 256>}, {pipeline_mode = #tpu.pipeline_mode<synchronous>, transform_indices = @transform_2, window_bounds = array<i64: 1, 256>}, {pipeline_mode = #tpu.pipeline_mode<synchronous>, transform_indices = @transform_3, window_bounds = array<i64: 256, 128>}, {pipeline_mode = #tpu.pipeline_mode<synchronous>, transform_indices = @transform_4, window_bounds = array<i64: 1, 128>}, {transform_indices = @transform_5, window_bounds = array<i64: 8, 256>}, {transform_indices = @transform_6, window_bounds = array<i64: 8, 128>}]} {
    %c0 = arith.constant 0 : index
    %c0_0 = arith.constant 0 : index
    %0 = vector.load %arg1[%c0, %c0_0] : memref<8x512xf32, #tpu.memory_space<vmem>>, vector<8x512xf32>
    %1 = arith.truncf %0 : vector<8x512xf32> to vector<8x512xbf16>
    %c0_1 = arith.constant 0 : index
    %c0_2 = arith.constant 0 : index
    %2 = vector.load %arg2[%c0_1, %c0_2] : memref<512x256xbf16, #tpu.memory_space<vmem>>, vector<512x256xbf16>
    %cst = arith.constant dense<0.000000e+00> : vector<8x256xf32>
    %3 = tpu.matmul %1, %2, %cst {dimension_numbers = #tpu.dot_dimension_numbers<[1], [0], [0], [1], [0, 0, 1, 1], [], []>} : vector<8x512xbf16>, vector<512x256xbf16>, vector<8x256xf32> -> vector<8x256xf32>
    %c0_3 = arith.constant 0 : index
    %c0_4 = arith.constant 0 : index
    %4 = vector.load %arg3[%c0_3, %c0_4] : memref<1x256xf32, #tpu.memory_space<vmem>>, vector<1x256xf32>
    %5 = vector.broadcast %4 : vector<1x256xf32> to vector<8x256xf32>
    %6 = arith.addf %3, %5 : vector<8x256xf32>
    %cst_5 = arith.constant 0.000000e+00 : f32
    %7 = vector.broadcast %cst_5 : f32 to vector<8x256xf32>
    %8 = arith.maximumf %6, %7 : vector<8x256xf32>
    %c0_6 = arith.constant 0 : index
    %c0_7 = arith.constant 0 : index
    %9 = vector.load %arg6[%c0_6, %c0_7] : memref<8x256xf32, #tpu.memory_space<vmem>>, vector<8x256xf32>
    tpu.vector_store %arg6[%c0_6, %c0_7], %8 {strides = array<i32>} : memref<8x256xf32, #tpu.memory_space<vmem>>, vector<8x256xf32>,
    %10 = arith.truncf %8 : vector<8x256xf32> to vector<8x256xbf16>
    %c0_8 = arith.constant 0 : index
    %c0_9 = arith.constant 0 : index
    %11 = vector.load %arg4[%c0_8, %c0_9] : memref<256x128xbf16, #tpu.memory_space<vmem>>, vector<256x128xbf16>
    %cst_10 = arith.constant dense<0.000000e+00> : vector<8x128xf32>
    %12 = tpu.matmul %10, %11, %cst_10 {dimension_numbers = #tpu.dot_dimension_numbers<[1], [0], [0], [1], [0, 0, 1, 1], [], []>} : vector<8x256xbf16>, vector<256x128xbf16>, vector<8x128xf32> -> vector<8x128xf32>
    %c0_11 = arith.constant 0 : index
    %c0_12 = arith.constant 0 : index
    %13 = vector.load %arg5[%c0_11, %c0_12] : memref<1x128xf32, #tpu.memory_space<vmem>>, vector<1x128xf32>
    %14 = vector.broadcast %13 : vector<1x128xf32> to vector<8x128xf32>
    %15 = arith.addf %12, %14 : vector<8x128xf32>
    %c0_13 = arith.constant 0 : index
    %c0_14 = arith.constant 0 : index
    %16 = vector.load %arg7[%c0_13, %c0_14] : memref<8x128xf32, #tpu.memory_space<vmem>>, vector<8x128xf32>
    tpu.vector_store %arg7[%c0_13, %c0_14], %15 {strides = array<i32>} : memref<8x128xf32, #tpu.memory_space<vmem>>, vector<8x128xf32>,
    return
  }
  func.func @transform_0(%arg0: i32) -> (i32, i32) {
    %c0_i32 = arith.constant 0 : i32
    %c0_i32_0 = arith.constant 0 : i32
    return %arg0, %c0_i32 : i32, i32
  }
  func.func @transform_1(%arg0: i32) -> (i32, i32) {
    %c0_i32 = arith.constant 0 : i32
    %c0_i32_0 = arith.constant 0 : i32
    %c0_i32_1 = arith.constant 0 : i32
    return %c0_i32, %c0_i32_0 : i32, i32
  }
  func.func @transform_2(%arg0: i32) -> (i32, i32) {
    %c0_i32 = arith.constant 0 : i32
    %c0_i32_0 = arith.constant 0 : i32
    %c0_i32_1 = arith.constant 0 : i32
    return %c0_i32, %c0_i32_0 : i32, i32
  }
  func.func @transform_3(%arg0: i32) -> (i32, i32) {
    %c0_i32 = arith.constant 0 : i32
    %c0_i32_0 = arith.constant 0 : i32
    %c0_i32_1 = arith.constant 0 : i32
    return %c0_i32, %c0_i32_0 : i32, i32
  }
  func.func @transform_4(%arg0: i32) -> (i32, i32) {
    %c0_i32 = arith.constant 0 : i32
    %c0_i32_0 = arith.constant 0 : i32
    %c0_i32_1 = arith.constant 0 : i32
    return %c0_i32, %c0_i32_0 : i32, i32
  }
  func.func @transform_5(%arg0: i32) -> (i32, i32) {
    %c0_i32 = arith.constant 0 : i32
    %c0_i32_0 = arith.constant 0 : i32
    return %arg0, %c0_i32 : i32, i32
  }
  func.func @transform_6(%arg0: i32) -> (i32, i32) {
    %c0_i32 = arith.constant 0 : i32
    %c0_i32_0 = arith.constant 0 : i32
    return %arg0, %c0_i32 : i32, i32
  }
}

</mosaic_0001>

<llo_original>
// kernel: classifier_forward.1
$region0: #{classifier_forward.1}
  #allocation0 [shape = 'u32[]', space=smem, size = 0x4, offset = 0x4, fixed_abs, tag = 'smem constant byte address 0x4 - core index']
  #allocation1 [shape = 'u32[72,128]{1,0:T(1,128)}', space=vmem, size = 0x9000, scoped, tag = 'internal scratch']
  %s0 = inlined_call_operand.hbm [shape: f32[8,512], index: 0, kind: input, shape index: {}]
  %s1 = inlined_call_operand.hbm [shape: bf16[512,256], index: 1, kind: input, shape index: {}]
  %s2 = inlined_call_operand.hbm [shape: f32[1,256], index: 2, kind: input, shape index: {}]
  %s3 = inlined_call_operand.hbm [shape: bf16[256,128], index: 3, kind: input, shape index: {}]
  %s4 = inlined_call_operand.vmem [shape: f32[1,128], index: 4, kind: input, shape index: {}]
  %s5 = inlined_call_operand.hbm [shape: f32[8,256], index: 5, kind: output, shape index: {0}]
  %s6 = inlined_call_operand.hbm [shape: f32[8,128], index: 6, kind: output, shape index: {1}]
  %7 = xla_tuple %s5, %s6
  %s8 = sld [smem:[#allocation0]]
  $region54: #{classifier_forward.1} parent=0
    _
  %s10 = ssub.s32 1, %s8
  %s11 = scalar_select 0, %s10, %s8
  $region1: #{classifier_forward.1} parent=0
    #allocation2 [shape = 'u8[16384]{0}', space=vmem, size = 0x4000, scoped, tag = 'input window, operand 0, single buffered']
    #allocation3 [shape = 's32[1]{0}', space=sflag, size = 0x4, scoped, tag = 'scoped memory for classifier_forward.1']
    #allocation4 [shape = 's32[1]{0}', space=sflag, size = 0x4, scoped, tag = 'scoped memory for classifier_forward.1']
    #allocation5 [shape = 'u8[262144]{0}', space=vmem, size = 0x40000, scoped, tag = 'input window, operand 1, single buffered']
    #allocation6 [shape = 's32[1]{0}', space=sflag, size = 0x4, scoped, tag = 'scoped memory for classifier_forward.1']
    #allocation7 [shape = 'u8[1024]{0}', space=vmem, size = 0x400, scoped, tag = 'input window, operand 2, single buffered']
    #allocation8 [shape = 'u8[65536]{0}', space=vmem, size = 0x10000, scoped, tag = 'input window, operand 3, single buffered']
    #allocation9 [shape = 's32[1]{0}', space=sflag, size = 0x4, scoped, tag = 'scoped memory for classifier_forward.1']
    #allocation10 [shape = 'u8[8192]{0}', space=vmem, size = 0x2000, scoped, tag = 'output window, operand 0, single buffered']
    #allocation11 [shape = 'u8[4096]{0}', space=vmem, size = 0x1000, scoped, tag = 'output window, operand 1, single buffered']
    #allocation12 [shape = 's32[1]{0}', space=sflag, size = 0x4, scoped, tag = 'scoped memory for classifier_forward.1']
    %12 = vsyncpa [#allocation3], 0
    %13 = vsyncpa [#allocation6], 0
    %14 = vsyncpa [#allocation9], 0
    %15 = vsyncpa [#allocation4], 0
    %16 = vsyncpa [#allocation12], 0
    // Predicated region
    $region2: #{classifier_forward.1} parent=1 // pred_check
      _
    $region3: #{classifier_forward.1} parent=1 // pred_check_branch
      %18 = sbr.rel (0) target = $region5
    $region4: #{classifier_forward.1} parent=1 // pred_region
      %20 = vsyncadd [#allocation3], 0
      %s22 = sshll.u32 %s0, 4
      %s23 = int_to_ptr.hbm [resolvable:$true] %s22
      %s24 = sshll.u32 [#allocation2], 4
      %s25 = int_to_ptr.vmem [resolvable:$true] %s24
      %27 = dma.hbm_to_vmem [thread:$0]  %s23, 512, %s25, [#allocation3]
    $region5: #{classifier_forward.1} parent=1 // pred_fallthru
      _
    // Predicated region
    $region6: #{classifier_forward.1} parent=1 // pred_check
      _
    $region7: #{classifier_forward.1} parent=1 // pred_check_branch
      %29 = sbr.rel (0) target = $region9
    $region8: #{classifier_forward.1} parent=1 // pred_region
      %31 = vsyncadd [#allocation6], 0
      %s32 = sshll.u32 %s1, 4
      %s33 = int_to_ptr.hbm [resolvable:$true] %s32
      %s34 = sshll.u32 [#allocation5], 4
      %s35 = int_to_ptr.vmem [resolvable:$true] %s34
      %40 = dma.hbm_to_vmem [thread:$0]  %s33, 8192, %s35, [#allocation6], 128, 128, 8
    $region9: #{classifier_forward.1} parent=1 // pred_fallthru
      _
    // Predicated region
    $region10: #{classifier_forward.1} parent=1 // pred_check
      _
    $region11: #{classifier_forward.1} parent=1 // pred_check_branch
      %42 = sbr.rel (0) target = $region13
    $region12: #{classifier_forward.1} parent=1 // pred_region
      %44 = vsyncadd [#allocation6], 0
      %s46 = sshll.u32 %s2, 4
      %s47 = int_to_ptr.hbm [resolvable:$true] %s46
      %s48 = sshll.u32 [#allocation7], 4
      %s49 = int_to_ptr.vmem [resolvable:$true] %s48
      %51 = dma.hbm_to_vmem [thread:$0]  %s47, 32, %s49, [#allocation6]
    $region13: #{classifier_forward.1} parent=1 // pred_fallthru
      _
    // Predicated region
    $region14: #{classifier_forward.1} parent=1 // pred_check
      _
    $region15: #{classifier_forward.1} parent=1 // pred_check_branch
      %53 = sbr.rel (0) target = $region17
    $region16: #{classifier_forward.1} parent=1 // pred_region
      %55 = vsyncadd [#allocation9], 0
      %s56 = sshll.u32 %s3, 4
      %s57 = int_to_ptr.hbm [resolvable:$true] %s56
      %s58 = sshll.u32 [#allocation8], 4
      %s59 = int_to_ptr.vmem [resolvable:$true] %s58
      %64 = dma.hbm_to_vmem [thread:$0]  %s57, 2048, %s59, [#allocation9], 64, 64, 4
    $region17: #{classifier_forward.1} parent=1 // pred_fallthru
      _
    // Predicated region
    $region18: #{classifier_forward.1} parent=1 // pred_check
      _
    $region19: #{classifier_forward.1} parent=1 // pred_check_branch
      %66 = sbr.rel (0) target = $region21
    $region20: #{classifier_forward.1} parent=1 // pred_region
      _
    $region21: #{classifier_forward.1} parent=1 // pred_fallthru
      _
    // Predicated region
    $region22: #{classifier_forward.1} parent=1 // pred_check
      _
    $region23: #{classifier_forward.1} parent=1 // pred_check_branch
      %68 = sbr.rel (0) target = $region25
    $region24: #{classifier_forward.1} parent=1 // pred_region
      %70 = dma.done [#allocation3], 512
    $region25: #{classifier_forward.1} parent=1 // pred_fallthru
      _
    // Predicated region
    $region26: #{classifier_forward.1} parent=1 // pred_check
      _
    $region27: #{classifier_forward.1} parent=1 // pred_check_branch
      %72 = sbr.rel (0) target = $region29
    $region28: #{classifier_forward.1} parent=1 // pred_region
      %74 = dma.done [#allocation6], 8192
    $region29: #{classifier_forward.1} parent=1 // pred_fallthru
      _
    // Predicated region
    $region30: #{classifier_forward.1} parent=1 // pred_check
      _
    $region31: #{classifier_forward.1} parent=1 // pred_check_branch
      %76 = sbr.rel (0) target = $region33
    $region32: #{classifier_forward.1} parent=1 // pred_region
      %78 = dma.done [#allocation6], 32
    $region33: #{classifier_forward.1} parent=1 // pred_fallthru
      _
    // Predicated region
    $region34: #{classifier_forward.1} parent=1 // pred_check
      _
    $region35: #{classifier_forward.1} parent=1 // pred_check_branch
      %80 = sbr.rel (0) target = $region37
    $region36: #{classifier_forward.1} parent=1 // pred_region
      %82 = dma.done [#allocation9], 2048
    $region37: #{classifier_forward.1} parent=1 // pred_fallthru
      _
    %v83 = vld [vmem:[#allocation2] sm:$0xff]
    %v84 = vld [vmem:[#allocation2 + $0x8] sm:$0xff]
    %v85 = vld [vmem:[#allocation2 + $0x10] sm:$0xff]
    %v86 = vld [vmem:[#allocation2 + $0x18] sm:$0xff]
    %v87 = vpack.c.bf16 %v83, %v83
    %v88 = vpack.c.bf16 %v84, %v84
    %v89 = vpack.c.bf16 %v85, %v85
    %v90 = vpack.c.bf16 %v86, %v86
    %v91 = vld [vmem:[#allocation5] sm:$0xff]
    %v92 = vld [vmem:[#allocation5 + $0x8] sm:$0xff]
    %v93 = vld [vmem:[#allocation5 + $0x10] sm:$0xff]
    %v94 = vld [vmem:[#allocation5 + $0x18] sm:$0xff]
    %v95 = vld [vmem:[#allocation5 + $0x20] sm:$0xff]
    %v96 = vld [vmem:[#allocation5 + $0x28] sm:$0xff]
    %v97 = vld [vmem:[#allocation5 + $0x30] sm:$0xff]
    %v98 = vld [vmem:[#allocation5 + $0x38] sm:$0xff]
    %v99 = vld [vmem:[#allocation5 + $0x40] sm:$0xff]
    %v100 = vld [vmem:[#allocation5 + $0x48] sm:$0xff]
    %v101 = vld [vmem:[#allocation5 + $0x50] sm:$0xff]
    %v102 = vld [vmem:[#allocation5 + $0x58] sm:$0xff]
    %v103 = vld [vmem:[#allocation5 + $0x60] sm:$0xff]
    %v104 = vld [vmem:[#allocation5 + $0x68] sm:$0xff]
    %v105 = vld [vmem:[#allocation5 + $0x70] sm:$0xff]
    %v106 = vld [vmem:[#allocation5 + $0x78] sm:$0xff]
    %v107 = vld [vmem:[#allocation5 + $0x80] sm:$0xff]
    %v108 = vld [vmem:[#allocation5 + $0x88] sm:$0xff]
    %v109 = vld [vmem:[#allocation5 + $0x90] sm:$0xff]
    %v110 = vld [vmem:[#allocation5 + $0x98] sm:$0xff]
    %v111 = vld [vmem:[#allocation5 + $0xa0] sm:$0xff]
    %v112 = vld [vmem:[#allocation5 + $0xa8] sm:$0xff]
    %v113 = vld [vmem:[#allocation5 + $0xb0] sm:$0xff]
    %v114 = vld [vmem:[#allocation5 + $0xb8] sm:$0xff]
    %v115 = vld [vmem:[#allocation5 + $0xc0] sm:$0xff]
    %v116 = vld [vmem:[#allocation5 + $0xc8] sm:$0xff]
    %v117 = vld [vmem:[#allocation5 + $0xd0] sm:$0xff]
    %v118 = vld [vmem:[#allocation5 + $0xd8] sm:$0xff]
    %v119 = vld [vmem:[#allocation5 + $0xe0] sm:$0xff]
    %v120 = vld [vmem:[#allocation5 + $0xe8] sm:$0xff]
    %v121 = vld [vmem:[#allocation5 + $0xf0] sm:$0xff]
    %v122 = vld [vmem:[#allocation5 + $0xf8] sm:$0xff]
    %v123 = vld [vmem:[#allocation5 + $0x100] sm:$0xff]
    %v124 = vld [vmem:[#allocation5 + $0x108] sm:$0xff]
    %v125 = vld [vmem:[#allocation5 + $0x110] sm:$0xff]
    %v126 = vld [vmem:[#allocation5 + $0x118] sm:$0xff]
    %v127 = vld [vmem:[#allocation5 + $0x120] sm:$0xff]
    %v128 = vld [vmem:[#allocation5 + $0x128] sm:$0xff]
    %v129 = vld [vmem:[#allocation5 + $0x130] sm:$0xff]
    %v130 = vld [vmem:[#allocation5 + $0x138] sm:$0xff]
    %v131 = vld [vmem:[#allocation5 + $0x140] sm:$0xff]
    %v132 = vld [vmem:[#allocation5 + $0x148] sm:$0xff]
    %v133 = vld [vmem:[#allocation5 + $0x150] sm:$0xff]
    %v134 = vld [vmem:[#allocation5 + $0x158] sm:$0xff]
    %v135 = vld [vmem:[#allocation5 + $0x160] sm:$0xff]
    %v136 = vld [vmem:[#allocation5 + $0x168] sm:$0xff]
    %v137 = vld [vmem:[#allocation5 + $0x170] sm:$0xff]
    %v138 = vld [vmem:[#allocation5 + $0x178] sm:$0xff]
    %v139 = vld [vmem:[#allocation5 + $0x180] sm:$0xff]
    %v140 = vld [vmem:[#allocation5 + $0x188] sm:$0xff]
    %v141 = vld [vmem:[#allocation5 + $0x190] sm:$0xff]
    %v142 = vld [vmem:[#allocation5 + $0x198] sm:$0xff]
    %v143 = vld [vmem:[#allocation5 + $0x1a0] sm:$0xff]
    %v144 = vld [vmem:[#allocation5 + $0x1a8] sm:$0xff]
    %v145 = vld [vmem:[#allocation5 + $0x1b0] sm:$0xff]
    %v146 = vld [vmem:[#allocation5 + $0x1b8] sm:$0xff]
    %v147 = vld [vmem:[#allocation5 + $0x1c0] sm:$0xff]
    %v148 = vld [vmem:[#allocation5 + $0x1c8] sm:$0xff]
    %v149 = vld [vmem:[#allocation5 + $0x1d0] sm:$0xff]
    %v150 = vld [vmem:[#allocation5 + $0x1d8] sm:$0xff]
    %v151 = vld [vmem:[#allocation5 + $0x1e0] sm:$0xff]
    %v152 = vld [vmem:[#allocation5 + $0x1e8] sm:$0xff]
    %v153 = vld [vmem:[#allocation5 + $0x1f0] sm:$0xff]
    %v154 = vld [vmem:[#allocation5 + $0x1f8] sm:$0xff]
    %v155 = vld [vmem:[#allocation7] sm:$0x3]
    %v157 = vperm.slane %v155, 0
    %v158 = vperm.slane %v155, 1
    %v225 = vunpack.c.l.b16 %v91
    %v226 = vunpack.c.h.b16 %v91
    %v227 = vunpack.c.l.b16 %v92
    %v228 = vunpack.c.h.b16 %v92
    %v229 = vunpack.c.l.b16 %v93
    %v230 = vunpack.c.h.b16 %v93
    %v231 = vunpack.c.l.b16 %v94
    %v232 = vunpack.c.h.b16 %v94
    %v233 = vunpack.c.l.b16 %v95
    %v234 = vunpack.c.h.b16 %v95
    %v235 = vunpack.c.l.b16 %v96
    %v236 = vunpack.c.h.b16 %v96
    %v237 = vunpack.c.l.b16 %v97
    %v238 = vunpack.c.h.b16 %v97
    %v239 = vunpack.c.l.b16 %v98
    %v240 = vunpack.c.h.b16 %v98
    %v241 = vunpack.c.l.b16 %v99
    %v242 = vunpack.c.h.b16 %v99
    %v243 = vunpack.c.l.b16 %v100
    %v244 = vunpack.c.h.b16 %v100
    %v245 = vunpack.c.l.b16 %v101
    %v246 = vunpack.c.h.b16 %v101
    %v247 = vunpack.c.l.b16 %v102
    %v248 = vunpack.c.h.b16 %v102
    %v249 = vunpack.c.l.b16 %v103
    %v250 = vunpack.c.h.b16 %v103
    %v251 = vunpack.c.l.b16 %v104
    %v252 = vunpack.c.h.b16 %v104
    %v253 = vunpack.c.l.b16 %v105
    %v254 = vunpack.c.h.b16 %v105
    %v255 = vunpack.c.l.b16 %v106
    %v256 = vunpack.c.h.b16 %v106
    %v257 = vunpack.c.l.b16 %v107
    %v258 = vunpack.c.h.b16 %v107
    %v259 = vunpack.c.l.b16 %v108
    %v260 = vunpack.c.h.b16 %v108
    %v261 = vunpack.c.l.b16 %v109
    %v262 = vunpack.c.h.b16 %v109
    %v263 = vunpack.c.l.b16 %v110
    %v264 = vunpack.c.h.b16 %v110
    %v265 = vunpack.c.l.b16 %v111
    %v266 = vunpack.c.h.b16 %v111
    %v267 = vunpack.c.l.b16 %v112
    %v268 = vunpack.c.h.b16 %v112
    %v269 = vunpack.c.l.b16 %v113
    %v270 = vunpack.c.h.b16 %v113
    %v271 = vunpack.c.l.b16 %v114
    %v272 = vunpack.c.h.b16 %v114
    %v273 = vunpack.c.l.b16 %v115
    %v274 = vunpack.c.h.b16 %v115
    %v275 = vunpack.c.l.b16 %v116
    %v276 = vunpack.c.h.b16 %v116
    %v277 = vunpack.c.l.b16 %v117
    %v278 = vunpack.c.h.b16 %v117
    %v279 = vunpack.c.l.b16 %v118
    %v280 = vunpack.c.h.b16 %v118
    %v281 = vunpack.c.l.b16 %v119
    %v282 = vunpack.c.h.b16 %v119
    %v283 = vunpack.c.l.b16 %v120
    %v284 = vunpack.c.h.b16 %v120
    %v285 = vunpack.c.l.b16 %v121
    %v286 = vunpack.c.h.b16 %v121
    %v287 = vunpack.c.l.b16 %v122
    %v288 = vunpack.c.h.b16 %v122
    %v289 = vunpack.c.l.b16 %v123
    %v290 = vunpack.c.h.b16 %v123
    %v291 = vunpack.c.l.b16 %v124
    %v292 = vunpack.c.h.b16 %v124
    %v293 = vunpack.c.l.b16 %v125
    %v294 = vunpack.c.h.b16 %v125
    %v295 = vunpack.c.l.b16 %v126
    %v296 = vunpack.c.h.b16 %v126
    %v297 = vunpack.c.l.b16 %v127
    %v298 = vunpack.c.h.b16 %v127
    %v299 = vunpack.c.l.b16 %v128
    %v300 = vunpack.c.h.b16 %v128
    %v301 = vunpack.c.l.b16 %v129
    %v302 = vunpack.c.h.b16 %v129
    %v303 = vunpack.c.l.b16 %v130
    %v304 = vunpack.c.h.b16 %v130
    %v305 = vunpack.c.l.b16 %v131
    %v306 = vunpack.c.h.b16 %v131
    %v307 = vunpack.c.l.b16 %v132
    %v308 = vunpack.c.h.b16 %v132
    %v309 = vunpack.c.l.b16 %v133
    %v310 = vunpack.c.h.b16 %v133
    %v311 = vunpack.c.l.b16 %v134
    %v312 = vunpack.c.h.b16 %v134
    %v313 = vunpack.c.l.b16 %v135
    %v314 = vunpack.c.h.b16 %v135
    %v315 = vunpack.c.l.b16 %v136
    %v316 = vunpack.c.h.b16 %v136
    %v317 = vunpack.c.l.b16 %v137
    %v318 = vunpack.c.h.b16 %v137
    %v319 = vunpack.c.l.b16 %v138
    %v320 = vunpack.c.h.b16 %v138
    %v321 = vunpack.c.l.b16 %v139
    %v322 = vunpack.c.h.b16 %v139
    %v323 = vunpack.c.l.b16 %v140
    %v324 = vunpack.c.h.b16 %v140
    %v325 = vunpack.c.l.b16 %v141
    %v326 = vunpack.c.h.b16 %v141
    %v327 = vunpack.c.l.b16 %v142
    %v328 = vunpack.c.h.b16 %v142
    %v329 = vunpack.c.l.b16 %v143
    %v330 = vunpack.c.h.b16 %v143
    %v331 = vunpack.c.l.b16 %v144
    %v332 = vunpack.c.h.b16 %v144
    %v333 = vunpack.c.l.b16 %v145
    %v334 = vunpack.c.h.b16 %v145
    %v335 = vunpack.c.l.b16 %v146
    %v336 = vunpack.c.h.b16 %v146
    %v337 = vunpack.c.l.b16 %v147
    %v338 = vunpack.c.h.b16 %v147
    %v339 = vunpack.c.l.b16 %v148
    %v340 = vunpack.c.h.b16 %v148
    %v341 = vunpack.c.l.b16 %v149
    %v342 = vunpack.c.h.b16 %v149
    %v343 = vunpack.c.l.b16 %v150
    %v344 = vunpack.c.h.b16 %v150
    %v345 = vunpack.c.l.b16 %v151
    %v346 = vunpack.c.h.b16 %v151
    %v347 = vunpack.c.l.b16 %v152
    %v348 = vunpack.c.h.b16 %v152
    %v349 = vunpack.c.l.b16 %v153
    %v350 = vunpack.c.h.b16 %v153
    %v351 = vunpack.c.l.b16 %v154
    %v352 = vunpack.c.h.b16 %v154
    %v353 = vpack.c.b16 %v227, %v225
    %v354 = vpack.c.b16 %v228, %v226
    %v355 = vpack.c.b16 %v231, %v229
    %v356 = vpack.c.b16 %v232, %v230
    %v357 = vpack.c.b16 %v235, %v233
    %v358 = vpack.c.b16 %v236, %v234
    %v359 = vpack.c.b16 %v239, %v237
    %v360 = vpack.c.b16 %v240, %v238
    %v361 = vpack.c.b16 %v243, %v241
    %v362 = vpack.c.b16 %v244, %v242
    %v363 = vpack.c.b16 %v247, %v245
    %v364 = vpack.c.b16 %v248, %v246
    %v365 = vpack.c.b16 %v251, %v249
    %v366 = vpack.c.b16 %v252, %v250
    %v367 = vpack.c.b16 %v255, %v253
    %v368 = vpack.c.b16 %v256, %v254
    %v369 = vpack.c.b16 %v259, %v257
    %v370 = vpack.c.b16 %v260, %v258
    %v371 = vpack.c.b16 %v263, %v261
    %v372 = vpack.c.b16 %v264, %v262
    %v373 = vpack.c.b16 %v267, %v265
    %v374 = vpack.c.b16 %v268, %v266
    %v375 = vpack.c.b16 %v271, %v269
    %v376 = vpack.c.b16 %v272, %v270
    %v377 = vpack.c.b16 %v275, %v273
    %v378 = vpack.c.b16 %v276, %v274
    %v379 = vpack.c.b16 %v279, %v277
    %v380 = vpack.c.b16 %v280, %v278
    %v381 = vpack.c.b16 %v283, %v281
    %v382 = vpack.c.b16 %v284, %v282
    %v383 = vpack.c.b16 %v287, %v285
    %v384 = vpack.c.b16 %v288, %v286
    %v385 = vpack.c.b16 %v291, %v289
    %v386 = vpack.c.b16 %v292, %v290
    %v387 = vpack.c.b16 %v295, %v293
    %v388 = vpack.c.b16 %v296, %v294
    %v389 = vpack.c.b16 %v299, %v297
    %v390 = vpack.c.b16 %v300, %v298
    %v391 = vpack.c.b16 %v303, %v301
    %v392 = vpack.c.b16 %v304, %v302
    %v393 = vpack.c.b16 %v307, %v305
    %v394 = vpack.c.b16 %v308, %v306
    %v395 = vpack.c.b16 %v311, %v309
    %v396 = vpack.c.b16 %v312, %v310
    %v397 = vpack.c.b16 %v315, %v313
    %v398 = vpack.c.b16 %v316, %v314
    %v399 = vpack.c.b16 %v319, %v317
    %v400 = vpack.c.b16 %v320, %v318
    %v401 = vpack.c.b16 %v323, %v321
    %v402 = vpack.c.b16 %v324, %v322
    %v403 = vpack.c.b16 %v327, %v325
    %v404 = vpack.c.b16 %v328, %v326
    %v405 = vpack.c.b16 %v331, %v329
    %v406 = vpack.c.b16 %v332, %v330
    %v407 = vpack.c.b16 %v335, %v333
    %v408 = vpack.c.b16 %v336, %v334
    %v409 = vpack.c.b16 %v339, %v337
    %v410 = vpack.c.b16 %v340, %v338
    %v411 = vpack.c.b16 %v343, %v341
    %v412 = vpack.c.b16 %v344, %v342
    %v413 = vpack.c.b16 %v347, %v345
    %v414 = vpack.c.b16 %v348, %v346
    %v415 = vpack.c.b16 %v351, %v349
    %v416 = vpack.c.b16 %v352, %v350
    %481 = vmatpush.bf16.msra.mxu0 %v367
    %482 = vmatpush.bf16.msra.mxu0 %v365
    %483 = vmatpush.bf16.msra.mxu0 %v363
    %484 = vmatpush.bf16.msra.mxu0 %v361
    %485 = vmatpush.bf16.msra.mxu0 %v359
    %486 = vmatpush.bf16.msra.mxu0 %v357
    %487 = vmatpush.bf16.msra.mxu0 %v355
    %488 = vmatpush.bf16.msra.mxu0 %v353
    %489 = vmatmul.bf16.gmra.mxu0 %v87
    %v490 = vpop.f32.mrf.mxu0
    %v491 = vadd.f32 %v157, %v490
    %v492 = vpop.f32.mrf.mxu0
    %493 = vdwg.mxu0
    %494 = vmatpush.bf16.msra.mxu0 %v383
    %495 = vmatpush.bf16.msra.mxu0 %v381
    %496 = vmatpush.bf16.msra.mxu0 %v379
    %497 = vmatpush.bf16.msra.mxu0 %v377
    %498 = vmatpush.bf16.msra.mxu0 %v375
    %499 = vmatpush.bf16.msra.mxu0 %v373
    %500 = vmatpush.bf16.msra.mxu0 %v371
    %501 = vmatpush.bf16.msra.mxu0 %v369
    %502 = vmatmul.bf16.gmra.mxu0 %v88
    %v503 = vpop.f32.mrf.mxu0
    %v504 = vadd.f32 %v491, %v503
    %v505 = vpop.f32.mrf.mxu0
    %506 = vdwg.mxu0
    %507 = vmatpush.bf16.msra.mxu0 %v399
    %508 = vmatpush.bf16.msra.mxu0 %v397
    %509 = vmatpush.bf16.msra.mxu0 %v395
    %510 = vmatpush.bf16.msra.mxu0 %v393
    %511 = vmatpush.bf16.msra.mxu0 %v391
    %512 = vmatpush.bf16.msra.mxu0 %v389
    %513 = vmatpush.bf16.msra.mxu0 %v387
    %514 = vmatpush.bf16.msra.mxu0 %v385
    %515 = vmatmul.bf16.gmra.mxu0 %v89
    %v516 = vpop.f32.mrf.mxu0
    %v517 = vadd.f32 %v504, %v516
    %v518 = vpop.f32.mrf.mxu0
    %519 = vdwg.mxu0
    %520 = vmatpush.bf16.msra.mxu0 %v415
    %521 = vmatpush.bf16.msra.mxu0 %v413
    %522 = vmatpush.bf16.msra.mxu0 %v411
    %523 = vmatpush.bf16.msra.mxu0 %v409
    %524 = vmatpush.bf16.msra.mxu0 %v407
    %525 = vmatpush.bf16.msra.mxu0 %v405
    %526 = vmatpush.bf16.msra.mxu0 %v403
    %527 = vmatpush.bf16.msra.mxu0 %v401
    %528 = vmatmul.bf16.gmra.mxu0 %v90
    %v529 = vpop.f32.mrf.mxu0
    %v530 = vadd.f32 %v517, %v529
    %v531 = vpop.f32.mrf.mxu0
    %532 = vdwg.mxu0
    %533 = vmatpush.bf16.msra.mxu0 %v368
    %534 = vmatpush.bf16.msra.mxu0 %v366
    %535 = vmatpush.bf16.msra.mxu0 %v364
    %536 = vmatpush.bf16.msra.mxu0 %v362
    %537 = vmatpush.bf16.msra.mxu0 %v360
    %538 = vmatpush.bf16.msra.mxu0 %v358
    %539 = vmatpush.bf16.msra.mxu0 %v356
    %540 = vmatpush.bf16.msra.mxu0 %v354
    %541 = vmatmul.bf16.gmra.mxu0 %v87
    %v542 = vpop.f32.mrf.mxu0
    %v543 = vadd.f32 %v158, %v542
    %v544 = vpop.f32.mrf.mxu0
    %545 = vdwg.mxu0
    %546 = vmatpush.bf16.msra.mxu0 %v384
    %547 = vmatpush.bf16.msra.mxu0 %v382
    %548 = vmatpush.bf16.msra.mxu0 %v380
    %549 = vmatpush.bf16.msra.mxu0 %v378
    %550 = vmatpush.bf16.msra.mxu0 %v376
    %551 = vmatpush.bf16.msra.mxu0 %v374
    %552 = vmatpush.bf16.msra.mxu0 %v372
    %553 = vmatpush.bf16.msra.mxu0 %v370
    %554 = vmatmul.bf16.gmra.mxu0 %v88
    %v555 = vpop.f32.mrf.mxu0
    %v556 = vadd.f32 %v543, %v555
    %v557 = vpop.f32.mrf.mxu0
    %558 = vdwg.mxu0
    %559 = vmatpush.bf16.msra.mxu0 %v400
    %560 = vmatpush.bf16.msra.mxu0 %v398
    %561 = vmatpush.bf16.msra.mxu0 %v396
    %562 = vmatpush.bf16.msra.mxu0 %v394
    %563 = vmatpush.bf16.msra.mxu0 %v392
    %564 = vmatpush.bf16.msra.mxu0 %v390
    %565 = vmatpush.bf16.msra.mxu0 %v388
    %566 = vmatpush.bf16.msra.mxu0 %v386
    %567 = vmatmul.bf16.gmra.mxu0 %v89
    %v568 = vpop.f32.mrf.mxu0
    %v569 = vadd.f32 %v556, %v568
    %v570 = vpop.f32.mrf.mxu0
    %571 = vdwg.mxu0
    %572 = vmatpush.bf16.msra.mxu0 %v416
    %573 = vmatpush.bf16.msra.mxu0 %v414
    %574 = vmatpush.bf16.msra.mxu0 %v412
    %575 = vmatpush.bf16.msra.mxu0 %v410
    %576 = vmatpush.bf16.msra.mxu0 %v408
    %577 = vmatpush.bf16.msra.mxu0 %v406
    %578 = vmatpush.bf16.msra.mxu0 %v404
    %579 = vmatpush.bf16.msra.mxu0 %v402
    %580 = vmatmul.bf16.gmra.mxu0 %v90
    %v581 = vpop.f32.mrf.mxu0
    %v582 = vadd.f32 %v569, %v581
    %v583 = vpop.f32.mrf.mxu0
    %584 = vdwg.mxu0
    %v585 = vmax.f32 %v530, 0.0
    %v586 = vmax.f32 %v582, 0.0
    %587 = vst [vmem:[#allocation10] sm:$0xff] %v585
    %588 = vst [vmem:[#allocation10 + $0x8] sm:$0xff] %v586
    %v589 = vpack.c.bf16 %v585, %v585
    %v590 = vpack.c.bf16 %v586, %v586
    %v591 = vld [vmem:[#allocation8] sm:$0xf]
    %v592 = vld [vmem:[#allocation8 + $0x4] sm:$0xf]
    %v593 = vld [vmem:[#allocation8 + $0x8] sm:$0xf]
    %v594 = vld [vmem:[#allocation8 + $0xc] sm:$0xf]
    %v595 = vld [vmem:[#allocation8 + $0x10] sm:$0xf]
    %v596 = vld [vmem:[#allocation8 + $0x14] sm:$0xf]
    %v597 = vld [vmem:[#allocation8 + $0x18] sm:$0xf]
    %v598 = vld [vmem:[#allocation8 + $0x1c] sm:$0xf]
    %v599 = vld [vmem:[#allocation8 + $0x20] sm:$0xf]
    %v600 = vld [vmem:[#allocation8 + $0x24] sm:$0xf]
    %v601 = vld [vmem:[#allocation8 + $0x28] sm:$0xf]
    %v602 = vld [vmem:[#allocation8 + $0x2c] sm:$0xf]
    %v603 = vld [vmem:[#allocation8 + $0x30] sm:$0xf]
    %v604 = vld [vmem:[#allocation8 + $0x34] sm:$0xf]
    %v605 = vld [vmem:[#allocation8 + $0x38] sm:$0xf]
    %v606 = vld [vmem:[#allocation8 + $0x3c] sm:$0xf]
    %v607 = vld [vmem:[#allocation8 + $0x40] sm:$0xf]
    %v608 = vld [vmem:[#allocation8 + $0x44] sm:$0xf]
    %v609 = vld [vmem:[#allocation8 + $0x48] sm:$0xf]
    %v610 = vld [vmem:[#allocation8 + $0x4c] sm:$0xf]
    %v611 = vld [vmem:[#allocation8 + $0x50] sm:$0xf]
    %v612 = vld [vmem:[#allocation8 + $0x54] sm:$0xf]
    %v613 = vld [vmem:[#allocation8 + $0x58] sm:$0xf]
    %v614 = vld [vmem:[#allocation8 + $0x5c] sm:$0xf]
    %v615 = vld [vmem:[#allocation8 + $0x60] sm:$0xf]
    %v616 = vld [vmem:[#allocation8 + $0x64] sm:$0xf]
    %v617 = vld [vmem:[#allocation8 + $0x68] sm:$0xf]
    %v618 = vld [vmem:[#allocation8 + $0x6c] sm:$0xf]
    %v619 = vld [vmem:[#allocation8 + $0x70] sm:$0xf]
    %v620 = vld [vmem:[#allocation8 + $0x74] sm:$0xf]
    %v621 = vld [vmem:[#allocation8 + $0x78] sm:$0xf]
    %v622 = vld [vmem:[#allocation8 + $0x7c] sm:$0xf]
    %v623 = vld [vmem:[%s4] sm:$0x1]
    %v625 = vperm.slane %v623, 0
    %v659 = vunpack.c.l.b16 %v591
    %v660 = vunpack.c.l.b16 %v592
    %v661 = vunpack.c.l.b16 %v593
    %v662 = vunpack.c.l.b16 %v594
    %v663 = vunpack.c.l.b16 %v595
    %v664 = vunpack.c.l.b16 %v596
    %v665 = vunpack.c.l.b16 %v597
    %v666 = vunpack.c.l.b16 %v598
    %v667 = vunpack.c.l.b16 %v599
    %v668 = vunpack.c.l.b16 %v600
    %v669 = vunpack.c.l.b16 %v601
    %v670 = vunpack.c.l.b16 %v602
    %v671 = vunpack.c.l.b16 %v603
    %v672 = vunpack.c.l.b16 %v604
    %v673 = vunpack.c.l.b16 %v605
    %v674 = vunpack.c.l.b16 %v606
    %v675 = vunpack.c.l.b16 %v607
    %v676 = vunpack.c.l.b16 %v608
    %v677 = vunpack.c.l.b16 %v609
    %v678 = vunpack.c.l.b16 %v610
    %v679 = vunpack.c.l.b16 %v611
    %v680 = vunpack.c.l.b16 %v612
    %v681 = vunpack.c.l.b16 %v613
    %v682 = vunpack.c.l.b16 %v614
    %v683 = vunpack.c.l.b16 %v615
    %v684 = vunpack.c.l.b16 %v616
    %v685 = vunpack.c.l.b16 %v617
    %v686 = vunpack.c.l.b16 %v618
    %v687 = vunpack.c.l.b16 %v619
    %v688 = vunpack.c.l.b16 %v620
    %v689 = vunpack.c.l.b16 %v621
    %v690 = vunpack.c.l.b16 %v622
    %v691 = vpack.c.b16 %v660, %v659
    %v692 = vpack.c.b16 %v662, %v661
    %v693 = vpack.c.b16 %v664, %v663
    %v694 = vpack.c.b16 %v666, %v665
    %v695 = vpack.c.b16 %v668, %v667
    %v696 = vpack.c.b16 %v670, %v669
    %v697 = vpack.c.b16 %v672, %v671
    %v698 = vpack.c.b16 %v674, %v673
    %v699 = vpack.c.b16 %v676, %v675
    %v700 = vpack.c.b16 %v678, %v677
    %v701 = vpack.c.b16 %v680, %v679
    %v702 = vpack.c.b16 %v682, %v681
    %v703 = vpack.c.b16 %v684, %v683
    %v704 = vpack.c.b16 %v686, %v685
    %v705 = vpack.c.b16 %v688, %v687
    %v706 = vpack.c.b16 %v690, %v689
    %723 = vmatpush.bf16.msra.mxu0 %v698
    %724 = vmatpush.bf16.msra.mxu0 %v697
    %725 = vmatpush.bf16.msra.mxu0 %v696
    %726 = vmatpush.bf16.msra.mxu0 %v695
    %727 = vmatpush.bf16.msra.mxu0 %v694
    %728 = vmatpush.bf16.msra.mxu0 %v693
    %729 = vmatpush.bf16.msra.mxu0 %v692
    %730 = vmatpush.bf16.msra.mxu0 %v691
    %731 = vmatmul.bf16.gmra.mxu0 %v589
    %v732 = vpop.f32.mrf.mxu0
    %v733 = vadd.f32 %v625, %v732
    %v734 = vpop.f32.mrf.mxu0
    %735 = vdwg.mxu0
    %736 = vmatpush.bf16.msra.mxu0 %v706
    %737 = vmatpush.bf16.msra.mxu0 %v705
    %738 = vmatpush.bf16.msra.mxu0 %v704
    %739 = vmatpush.bf16.msra.mxu0 %v703
    %740 = vmatpush.bf16.msra.mxu0 %v702
    %741 = vmatpush.bf16.msra.mxu0 %v701
    %742 = vmatpush.bf16.msra.mxu0 %v700
    %743 = vmatpush.bf16.msra.mxu0 %v699
    %744 = vmatmul.bf16.gmra.mxu0 %v590
    %v745 = vpop.f32.mrf.mxu0
    %v746 = vadd.f32 %v733, %v745
    %v747 = vpop.f32.mrf.mxu0
    %748 = vdwg.mxu0
    %749 = vst [vmem:[#allocation11] sm:$0xff] %v746
    // Predicated region
    $region38: #{classifier_forward.1} parent=1 // pred_check
      _
    $region39: #{classifier_forward.1} parent=1 // pred_check_branch
      %751 = sbr.rel (0) target = $region41
    $region40: #{classifier_forward.1} parent=1 // pred_region
      %753 = vsyncadd [#allocation4], 0
      %s755 = sshll.u32 [#allocation10], 4
      %s756 = int_to_ptr.vmem [resolvable:$true] %s755
      %s757 = sshll.u32 %s5, 4
      %s758 = int_to_ptr.hbm [resolvable:$true] %s757
      %760 = dma.vmem_to_hbm [thread:$0]  %s756, 256, %s758, [#allocation4]
    $region41: #{classifier_forward.1} parent=1 // pred_fallthru
      _
    // Predicated region
    $region42: #{classifier_forward.1} parent=1 // pred_check
      _
    $region43: #{classifier_forward.1} parent=1 // pred_check_branch
      %762 = sbr.rel (0) target = $region45
    $region44: #{classifier_forward.1} parent=1 // pred_region
      %764 = vsyncadd [#allocation12], 0
      %s766 = sshll.u32 [#allocation11], 4
      %s767 = int_to_ptr.vmem [resolvable:$true] %s766
      %s768 = sshll.u32 %s6, 4
      %s769 = int_to_ptr.hbm [resolvable:$true] %s768
      %771 = dma.vmem_to_hbm [thread:$0]  %s767, 128, %s769, [#allocation12]
    $region45: #{classifier_forward.1} parent=1 // pred_fallthru
      _
    // Predicated region
    $region46: #{classifier_forward.1} parent=1 // pred_check
      _
    $region47: #{classifier_forward.1} parent=1 // pred_check_branch
      %773 = sbr.rel (0) target = $region49
    $region48: #{classifier_forward.1} parent=1 // pred_region
      %775 = dma.done [#allocation4], 256
    $region49: #{classifier_forward.1} parent=1 // pred_fallthru
      _
    // Predicated region
    $region50: #{classifier_forward.1} parent=1 // pred_check
      _
    $region51: #{classifier_forward.1} parent=1 // pred_check_branch
      %777 = sbr.rel (0) target = $region53
    $region52: #{classifier_forward.1} parent=1 // pred_region
      %779 = dma.done [#allocation12], 128
    $region53: #{classifier_forward.1} parent=1 // pred_fallthru
      _
    %780 = vsyncpa [#allocation3], 1
    %781 = vsyncpa [#allocation6], 1
    %782 = vsyncpa [#allocation9], 1
    %783 = vsyncpa [#allocation4], 1
    %784 = vsyncpa [#allocation12], 1

</llo_original>
